<compile_context>
chip_gen: v5e
topology: v5e:2x2
jax: 0.10.0
libtpu: 0.0.40
codegen_flags: <defaults>
</compile_context>

<pallas_src>
import math

import jax
import jax.numpy as jnp
from jax.experimental import pallas as pl
from jax.experimental.pallas import tpu as pltpu


def _copy_kernel(x_ref, o_ref):
    # Identity copy of one lane/sublane-dense VMEM tile.  The reshape to the
    # target shape is metadata-only and happens outside the kernel.
    o_ref[...] = x_ref[...]


def _pick_lane_width(total):
    """Largest multiple-of-128 lane width that evenly divides `total`."""
    for c in (1024, 512, 256, 128):
        if total % c == 0:
            return c
    return None


def unflatten(x, target_shape, *, block_bytes=2 << 20):
    """Pallas-backed equivalent of UnFlatten(target_shape)(x).

    x: array of shape (B, ...) whose trailing dims flatten to prod(target_shape).
    Returns array of shape (B, *target_shape), same dtype.
    """
    B = x.shape[0]
    N = math.prod(target_shape)
    assert math.prod(x.shape[1:]) == N, (
        f"cannot reshape {x.shape} to (B={B}, {target_shape})")

    out_shape = (B, *target_shape)
    total = B * N

    # No well-shaped (x128) tiling possible -> the metadata-only reshape is
    # already the optimal "kernel" (zero HBM traffic), so just return the view.
    lane = _pick_lane_width(total)
    if lane is None:
        return x.reshape(out_shape)

    # Lane/sublane-dense 2-D view of the entire buffer (independent of B).
    rows = total // lane
    x2 = x.reshape(rows, lane)

    # ~block_bytes per block, sublane dim a multiple of 8 (or full extent).
    itemsize = jnp.dtype(x.dtype).itemsize
    tile_r = max(8, (block_bytes // (lane * itemsize)) // 8 * 8)
    if tile_r >= rows:
        tile_r = rows  # full extent along sublanes is always legal
    grid = (pl.cdiv(rows, tile_r),)

    y2 = pl.pallas_call(
        _copy_kernel,
        out_shape=jax.ShapeDtypeStruct((rows, lane), x2.dtype),
        grid_spec=pltpu.PrefetchScalarGridSpec(
            num_scalar_prefetch=0,
            grid=grid,
            in_specs=[pl.BlockSpec((tile_r, lane), lambda i: (i, 0))],
            out_specs=pl.BlockSpec((tile_r, lane), lambda i: (i, 0)),
        ),
        compiler_params=pltpu.CompilerParams(
            dimension_semantics=("parallel",)),
        # Identity copy: alias input 0 to output 0 so no second HBM buffer is
        # required and the copy can be elided / done in place by XLA.
        input_output_aliases={0: 0},
    )(x2)

    # Final reshape to (B, *target_shape) -- metadata only, no data movement.
    return y2.reshape(out_shape)


if __name__ == "__main__":
    key = jax.random.PRNGKey(0)
    k0, k1, k2 = jax.random.split(key, 3)

    # Case 1: module config UnFlatten(target_shape=(4, 16, 16)), flat input
    # (B, N) as produced by e.g. a Linear layer in an autoencoder.
    target_shape = (4, 16, 16)
    B = 2
    N = math.prod(target_shape)  # 1024
    x = jax.random.normal(k0, (B, N), dtype=jnp.float32)
    y = jax.block_until_ready(unflatten(x, target_shape))
    y_ref = x.reshape((B, *target_shape))
    assert y.shape == (B, *target_shape) and y.dtype == x.dtype
    assert bool(jnp.array_equal(y, y_ref))

    # Case 2: larger flat input with a small block budget to exercise a
    # multi-step grid (rows=64, tile_r=8 -> 8 grid steps).
    target_shape2 = (4, 64, 128)
    x2 = jax.random.normal(k1, (B, math.prod(target_shape2)), dtype=jnp.float32)
    y2 = jax.block_until_ready(unflatten(x2, target_shape2, block_bytes=32 * 1024))
    assert bool(jnp.array_equal(y2, x2.reshape((B, *target_shape2))))

    # Case 3: element count not a multiple of 128 -> metadata-only fallback.
    target_shape3 = (3, 5, 7)
    x3 = jax.random.normal(k2, (B, math.prod(target_shape3)), dtype=jnp.float32)
    y3 = jax.block_until_ready(unflatten(x3, target_shape3))
    assert bool(jnp.array_equal(y3, x3.reshape((B, *target_shape3))))

    print("KERNEL_OK")
</pallas_src>

<mosaic_0001>
module attributes {stable_mosaic.version = 11 : i64} {
  func.func @_copy_kernel(%arg0: i32, %arg1: memref<2x1024xf32, #tpu.memory_space<vmem>>, %arg2: memref<2x1024xf32, #tpu.memory_space<vmem>>) attributes {dimension_semantics = [#tpu.dimension_semantics<parallel>], iteration_bounds = array<i64: 1>, scalar_prefetch = 0 : i64, scratch_operands = 0 : i64, tpu.core_type = #tpu.core_type<tc>, window_params = [{transform_indices = @transform_0, window_bounds = array<i64: 2, 1024>}, {transform_indices = @transform_1, window_bounds = array<i64: 2, 1024>}]} {
    %c0 = arith.constant 0 : index
    %c0_0 = arith.constant 0 : index
    %0 = vector.load %arg1[%c0, %c0_0] : memref<2x1024xf32, #tpu.memory_space<vmem>>, vector<2x1024xf32>
    %c0_1 = arith.constant 0 : index
    %c0_2 = arith.constant 0 : index
    %1 = vector.load %arg2[%c0_1, %c0_2] : memref<2x1024xf32, #tpu.memory_space<vmem>>, vector<2x1024xf32>
    tpu.vector_store %arg2[%c0_1, %c0_2], %0 {strides = array<i32>} : memref<2x1024xf32, #tpu.memory_space<vmem>>, vector<2x1024xf32>,
    return
  }
  func.func @transform_0(%arg0: i32) -> (i32, i32) {
    %c0_i32 = arith.constant 0 : i32
    %c0_i32_0 = arith.constant 0 : i32
    return %arg0, %c0_i32 : i32, i32
  }
  func.func @transform_1(%arg0: i32) -> (i32, i32) {
    %c0_i32 = arith.constant 0 : i32
    %c0_i32_0 = arith.constant 0 : i32
    return %arg0, %c0_i32 : i32, i32
  }
}

</mosaic_0001>

<llo_original>
// kernel: tpu_custom_call.1
$region0: #{tpu_custom_call.1}
  #allocation0 [shape = 'u32[]', space=smem, size = 0x4, offset = 0x4, fixed_abs, tag = 'smem constant byte address 0x4 - core index']
  #allocation1 [shape = 'u32[72,128]{1,0:T(1,128)}', space=vmem, size = 0x9000, scoped, tag = 'internal scratch']
  %s0 = inlined_call_operand.hbm [shape: f32[2,1024], index: 0, kind: input, shape index: {}, may-alias: {0,1}]
  %s1 = inlined_call_operand.hbm [shape: f32[2,1024], index: 1, kind: output, shape index: {}, may-alias: {0,1}]
  %s2 = sld [smem:[#allocation0]]
  $region18: #{tpu_custom_call.1} parent=0
    _
  %s4 = ssub.s32 1, %s2
  %s5 = scalar_select 0, %s4, %s2
  $region1: #{tpu_custom_call.1} parent=0
    #allocation2 [shape = 'u8[8192]{0}', space=vmem, size = 0x2000, scoped, tag = 'input window, operand 0, single buffered']
    #allocation3 [shape = 's32[1]{0}', space=sflag, size = 0x4, scoped, tag = 'scoped memory for tpu_custom_call.1']
    #allocation4 [shape = 's32[1]{0}', space=sflag, size = 0x4, scoped, tag = 'scoped memory for tpu_custom_call.1']
    #allocation5 [shape = 'u8[8192]{0}', space=vmem, size = 0x2000, scoped, tag = 'output window, operand 0, single buffered']
    %6 = vsyncpa [#allocation3], 0
    %7 = vsyncpa [#allocation4], 0
    // Predicated region
    $region2: #{tpu_custom_call.1} parent=1 // pred_check
      _
    $region3: #{tpu_custom_call.1} parent=1 // pred_check_branch
      %9 = sbr.rel (0) target = $region5
    $region4: #{tpu_custom_call.1} parent=1 // pred_region
      %11 = vsyncadd [#allocation3], 0
      %s13 = sshll.u32 %s0, 4
      %s14 = int_to_ptr.hbm [resolvable:$true] %s13
      %s15 = sshll.u32 [#allocation2], 4
      %s16 = int_to_ptr.vmem [resolvable:$true] %s15
      %18 = dma.hbm_to_vmem [thread:$0]  %s14, 256, %s16, [#allocation3]
    $region5: #{tpu_custom_call.1} parent=1 // pred_fallthru
      _
    // Predicated region
    $region6: #{tpu_custom_call.1} parent=1 // pred_check
      _
    $region7: #{tpu_custom_call.1} parent=1 // pred_check_branch
      %20 = sbr.rel (0) target = $region9
    $region8: #{tpu_custom_call.1} parent=1 // pred_region
      %22 = dma.done [#allocation3], 256
    $region9: #{tpu_custom_call.1} parent=1 // pred_fallthru
      _
    %v23 = vld [vmem:[#allocation2] sm:$0xff]
    %v24 = vld [vmem:[#allocation2 + $0x8] sm:$0xff]
    %25 = vst [vmem:[#allocation5] sm:$0xff] %v23
    %26 = vst [vmem:[#allocation5 + $0x8] sm:$0xff] %v24
    // Predicated region
    $region10: #{tpu_custom_call.1} parent=1 // pred_check
      _
    $region11: #{tpu_custom_call.1} parent=1 // pred_check_branch
      %28 = sbr.rel (0) target = $region13
    $region12: #{tpu_custom_call.1} parent=1 // pred_region
      %30 = vsyncadd [#allocation4], 0
      %s32 = sshll.u32 [#allocation5], 4
      %s33 = int_to_ptr.vmem [resolvable:$true] %s32
      %s34 = sshll.u32 %s1, 4
      %s35 = int_to_ptr.hbm [resolvable:$true] %s34
      %37 = dma.vmem_to_hbm [thread:$0]  %s33, 256, %s35, [#allocation4]
    $region13: #{tpu_custom_call.1} parent=1 // pred_fallthru
      _
    // Predicated region
    $region14: #{tpu_custom_call.1} parent=1 // pred_check
      _
    $region15: #{tpu_custom_call.1} parent=1 // pred_check_branch
      %39 = sbr.rel (0) target = $region17
    $region16: #{tpu_custom_call.1} parent=1 // pred_region
      %41 = dma.done [#allocation4], 256
    $region17: #{tpu_custom_call.1} parent=1 // pred_fallthru
      _
    %42 = vsyncpa [#allocation3], 1
    %43 = vsyncpa [#allocation4], 1

</llo_original>
